<compile_context>
chip_gen: v7x
topology: tpu7x:2x2x1
jax: 0.10.0
libtpu: 0.0.40
codegen_flags: <defaults>
</compile_context>

<pallas_src>
import functools

import jax
import jax.numpy as jnp
from jax.experimental import pallas as pl
from jax.experimental.pallas import tpu as pltpu


def _attention_kernel(s_ref, h_ref, o_ref):
    h = h_ref[...].astype(jnp.float32)        # (Bb, T, D)
    s = s_ref[...].astype(jnp.float32)        # (Bb, 1, D)

    # scores[b, 0, t] = <h[b, t, :], s[b, :]>   == torch.bmm(h, s.unsqueeze(-1))
    scores = jnp.einsum("bqd,btd->bqt", s, h,
                        preferred_element_type=jnp.float32)      # (Bb, 1, T)

    # softmax over time (dim=1 of the (B, T, 1) tensor in the PyTorch code),
    # numerically stabilized; lane-axis reductions.
    m = jnp.max(scores, axis=-1, keepdims=True)
    e = jnp.exp(scores - m)
    alpha = e / jnp.sum(e, axis=-1, keepdims=True)               # (Bb, 1, T)

    # c = torch.bmm(alpha.transpose(1, 2), h)  -> (Bb, 1, D)
    c = jnp.einsum("bqt,btd->bqd", alpha, h,
                   preferred_element_type=jnp.float32)
    o_ref[...] = c.astype(o_ref.dtype)


@functools.partial(jax.jit, static_argnames=("block_b",))
def _attention_call(s3, h, block_b):
    B, T, D = h.shape
    return pl.pallas_call(
        _attention_kernel,
        out_shape=jax.ShapeDtypeStruct((B, 1, D), jnp.float32),
        grid_spec=pltpu.PrefetchScalarGridSpec(
            num_scalar_prefetch=0,
            grid=(pl.cdiv(B, block_b),),
            in_specs=[
                pl.BlockSpec((block_b, 1, D), lambda b: (b, 0, 0)),   # s
                pl.BlockSpec((block_b, T, D), lambda b: (b, 0, 0)),   # h
            ],
            out_specs=pl.BlockSpec((block_b, 1, D), lambda b: (b, 0, 0)),
        ),
        compiler_params=pltpu.CompilerParams(
            dimension_semantics=("parallel",),   # batch chunks are independent
        ),
    )(s3, h)[:, 0, :]


def attention(s, h, mask=None, *, block_b=8):
    """Pallas equivalent of Attention.forward(s, h, mask)."""
    if mask is not None:
        # torch: h = h.masked_fill(mask, -1e9), applied before both bmm's.
        h = jnp.where(mask, jnp.asarray(-1e9, h.dtype), h)
    bb = int(min(block_b, h.shape[0]))
    return _attention_call(s[:, None, :].astype(jnp.float32),
                           h.astype(jnp.float32), bb)


if __name__ == "__main__":
    # Small shapes consistent with the module: B=2, T=8, D=32.
    batch, seq, hidden = 2, 8, 32
    key = jax.random.PRNGKey(0)
    ks, kh = jax.random.split(key)
    s = jax.random.normal(ks, (batch, hidden), jnp.float32)
    h = jax.random.normal(kh, (batch, seq, hidden), jnp.float32)

    c = attention(s, h)            # mask=None, matching the default forward call
    c = jax.block_until_ready(c)

    # Pure-JAX reference mirroring the PyTorch module exactly.
    scores = jnp.einsum("btd,bd->bt", h, s)
    alpha = jax.nn.softmax(scores, axis=-1)
    c_ref = jnp.einsum("bt,btd->bd", alpha, h)

    assert c.shape == (batch, hidden), c.shape
    assert jnp.allclose(c, c_ref, atol=1e-5, rtol=1e-5), \
        float(jnp.max(jnp.abs(c - c_ref)))
    print("KERNEL_OK")
</pallas_src>

<mosaic_0001>
module attributes {stable_mosaic.version = 11 : i64} {
  func.func @_attention_kernel(%arg0: i32, %arg1: memref<2x1x32xf32, #tpu.memory_space<vmem>>, %arg2: memref<2x8x32xf32, #tpu.memory_space<vmem>>, %arg3: memref<2x1x32xf32, #tpu.memory_space<vmem>>) attributes {dimension_semantics = [#tpu.dimension_semantics<parallel>], iteration_bounds = array<i64: 1>, scalar_prefetch = 0 : i64, scratch_operands = 0 : i64, tpu.core_type = #tpu.core_type<tc>, window_params = [{transform_indices = @transform_0, window_bounds = array<i64: 2, 1, 32>}, {transform_indices = @transform_1, window_bounds = array<i64: 2, 8, 32>}, {transform_indices = @transform_2, window_bounds = array<i64: 2, 1, 32>}]} {
    %c0 = arith.constant 0 : index
    %c0_0 = arith.constant 0 : index
    %c0_1 = arith.constant 0 : index
    %0 = vector.load %arg2[%c0, %c0_0, %c0_1] : memref<2x8x32xf32, #tpu.memory_space<vmem>>, vector<2x8x32xf32>
    %c0_2 = arith.constant 0 : index
    %c0_3 = arith.constant 0 : index
    %c0_4 = arith.constant 0 : index
    %1 = vector.load %arg1[%c0_2, %c0_3, %c0_4] : memref<2x1x32xf32, #tpu.memory_space<vmem>>, vector<2x1x32xf32>
    "tpu.trace_start"() <{level = 10 : i32, message = "bqd,btd->bqt"}> : () -> ()
    %cst = arith.constant dense<0.000000e+00> : vector<2x1x8xf32>
    %2 = tpu.matmul %1, %0, %cst {dimension_numbers = #tpu.dot_dimension_numbers<[2], [2], [1], [1], [0, 0, 0, 1, 1, 1], [0], [0]>} : vector<2x1x32xf32>, vector<2x8x32xf32>, vector<2x1x8xf32> -> vector<2x1x8xf32>
    "tpu.trace_stop"() : () -> ()
    %cst_5 = arith.constant dense<0xFF800000> : vector<2x1xf32>
    %3 = vector.multi_reduction <maximumf>, %2, %cst_5 [2] : vector<2x1x8xf32> to vector<2x1xf32>
    %4 = vector.shape_cast %3 : vector<2x1xf32> to vector<2x1x1xf32>
    %5 = vector.broadcast %4 : vector<2x1x1xf32> to vector<2x1x8xf32>
    %6 = arith.subf %2, %5 : vector<2x1x8xf32>
    %7 = math.exp %6 : vector<2x1x8xf32>
    %cst_6 = arith.constant dense<0.000000e+00> : vector<2x1xf32>
    %8 = vector.multi_reduction <add>, %7, %cst_6 [2] : vector<2x1x8xf32> to vector<2x1xf32>
    %9 = vector.shape_cast %8 : vector<2x1xf32> to vector<2x1x1xf32>
    %10 = vector.broadcast %9 : vector<2x1x1xf32> to vector<2x1x8xf32>
    %11 = arith.divf %7, %10 : vector<2x1x8xf32>
    "tpu.trace_start"() <{level = 10 : i32, message = "bqt,btd->bqd"}> : () -> ()
    %cst_7 = arith.constant dense<0.000000e+00> : vector<2x1x32xf32>
    %12 = tpu.matmul %11, %0, %cst_7 {dimension_numbers = #tpu.dot_dimension_numbers<[2], [1], [1], [2], [0, 0, 0, 1, 1, 2], [0], [0]>} : vector<2x1x8xf32>, vector<2x8x32xf32>, vector<2x1x32xf32> -> vector<2x1x32xf32>
    "tpu.trace_stop"() : () -> ()
    %c0_8 = arith.constant 0 : index
    %c0_9 = arith.constant 0 : index
    %c0_10 = arith.constant 0 : index
    %13 = vector.load %arg3[%c0_8, %c0_9, %c0_10] : memref<2x1x32xf32, #tpu.memory_space<vmem>>, vector<2x1x32xf32>
    tpu.vector_store %arg3[%c0_8, %c0_9, %c0_10], %12 {strides = array<i32>} : memref<2x1x32xf32, #tpu.memory_space<vmem>>, vector<2x1x32xf32>,
    return
  }
  func.func @transform_0(%arg0: i32) -> (i32, i32, i32) {
    %c0_i32 = arith.constant 0 : i32
    %c0_i32_0 = arith.constant 0 : i32
    %c0_i32_1 = arith.constant 0 : i32
    return %arg0, %c0_i32, %c0_i32_0 : i32, i32, i32
  }
  func.func @transform_1(%arg0: i32) -> (i32, i32, i32) {
    %c0_i32 = arith.constant 0 : i32
    %c0_i32_0 = arith.constant 0 : i32
    %c0_i32_1 = arith.constant 0 : i32
    return %arg0, %c0_i32, %c0_i32_0 : i32, i32, i32
  }
  func.func @transform_2(%arg0: i32) -> (i32, i32, i32) {
    %c0_i32 = arith.constant 0 : i32
    %c0_i32_0 = arith.constant 0 : i32
    %c0_i32_1 = arith.constant 0 : i32
    return %arg0, %c0_i32, %c0_i32_0 : i32, i32, i32
  }
}

</mosaic_0001>

<llo_original>
// kernel: _attention_call.1
$region0: #{_attention_call.1}
  #allocation0 [shape = 'u32[]', space=smem, size = 0x4, offset = 0x4, fixed_abs, tag = 'smem constant byte address 0x4 - core index']
  #allocation1 [shape = 'u32[144,128]{1,0:T(1,128)}', space=vmem, size = 0x12000, scoped, tag = 'internal scratch']
  %s0 = inlined_call_operand.hbm [shape: f32[2,1,32], index: 0, kind: input, shape index: {}]
  %s1 = inlined_call_operand.hbm [shape: f32[2,8,32], index: 1, kind: input, shape index: {}]
  %s2 = inlined_call_operand.hbm [shape: f32[2,1,32], index: 2, kind: output, shape index: {}]
  %s3 = sld [smem:[#allocation0]]
  $region26: #{_attention_call.1} parent=0
    _
  %s5 = ssub.s32 1, %s3
  %s6 = scalar_select 0, %s5, %s3
  $region1: #{_attention_call.1} parent=0
    #allocation2 [shape = 'u8[1024]{0}', space=vmem, size = 0x400, scoped, tag = 'input window, operand 0, single buffered']
    #allocation3 [shape = 's32[1]{0}', space=sflag, size = 0x4, scoped, tag = 'scoped memory for _attention_call.1']
    #allocation4 [shape = 's32[1]{0}', space=sflag, size = 0x4, scoped, tag = 'scoped memory for _attention_call.1']
    #allocation5 [shape = 'u8[8192]{0}', space=vmem, size = 0x2000, scoped, tag = 'input window, operand 1, single buffered']
    #allocation6 [shape = 's32[1]{0}', space=sflag, size = 0x4, scoped, tag = 'scoped memory for _attention_call.1']
    #allocation7 [shape = 'u8[1024]{0}', space=vmem, size = 0x400, scoped, tag = 'output window, operand 0, single buffered']
    %7 = vsyncpa [#allocation3], 0
    %8 = vsyncpa [#allocation6], 0
    %9 = vsyncpa [#allocation4], 0
    // Predicated region
    $region2: #{_attention_call.1} parent=1 // pred_check
      _
    $region3: #{_attention_call.1} parent=1 // pred_check_branch
      %11 = sbr.rel (0) target = $region5
    $region4: #{_attention_call.1} parent=1 // pred_region
      %s13 = ssub.s32 32, 32
      %14 = vsyncadd [#allocation3], %s13
      %s15 = sshll.u32 [#allocation2], 4
      %s16 = int_to_ptr.vmem [resolvable:$true] %s15
      %21 = dma.hbm_to_vmem [thread:$0]  %s0, 32, %s16, [#allocation3], 16, 16, 1
    $region5: #{_attention_call.1} parent=1 // pred_fallthru
      _
    // Predicated region
    $region6: #{_attention_call.1} parent=1 // pred_check
      _
    $region7: #{_attention_call.1} parent=1 // pred_check_branch
      %23 = sbr.rel (0) target = $region9
    $region8: #{_attention_call.1} parent=1 // pred_region
      %s25 = ssub.s32 256, 256
      %26 = vsyncadd [#allocation6], %s25
      %s27 = sshll.u32 [#allocation5], 4
      %s28 = int_to_ptr.vmem [resolvable:$true] %s27
      %33 = dma.hbm_to_vmem [thread:$0]  %s1, 256, %s28, [#allocation6], 128, 128, 8
    $region9: #{_attention_call.1} parent=1 // pred_fallthru
      _
    // Predicated region
    $region10: #{_attention_call.1} parent=1 // pred_check
      _
    $region11: #{_attention_call.1} parent=1 // pred_check_branch
      %35 = sbr.rel (0) target = $region13
    $region12: #{_attention_call.1} parent=1 // pred_region
      %36 = dma.done [#allocation3], 32
    $region13: #{_attention_call.1} parent=1 // pred_fallthru
      _
    // Predicated region
    $region14: #{_attention_call.1} parent=1 // pred_check
      _
    $region15: #{_attention_call.1} parent=1 // pred_check_branch
      %38 = sbr.rel (0) target = $region17
    $region16: #{_attention_call.1} parent=1 // pred_region
      %39 = dma.done [#allocation6], 256
    $region17: #{_attention_call.1} parent=1 // pred_fallthru
      _
    %v40 = vld [vmem:[#allocation5] sm:$0xff]
    %v41 = vld [vmem:[#allocation5 + $0x8] sm:$0xff]
    %v42 = vld [vmem:[#allocation2] sm:$0x1]
    %v43 = vld [vmem:[#allocation2 + $0x1] sm:$0x1]
    %vm44 = vcmask 261120
    %v46 = vsel %vm44, %v42, 0
    %v49 = vsel %vm44, %v40, 0
    %51 = vmatprep.subr.mxu0 0.0
    %52 = vmatpush1.xpose.msra.mxu0 %v49
    %53 = vmatprep.subr.mxu0 0.0
    %54 = vmatpush1.xpose.msra.mxu0 0.0
    %55 = vmatprep.subr.mxu0 0.0
    %56 = vmatpush1.xpose.msra.mxu0 0.0
    %57 = vmatprep.subr.mxu0 0.0
    %58 = vmatpush1.xpose.msra.mxu0 0.0
    %59 = vmatprep.subr.mxu0 0.0
    %60 = vmatpush1.xpose.msra.mxu0 0.0
    %61 = vmatprep.subr.mxu0 0.0
    %62 = vmatpush1.xpose.msra.mxu0 0.0
    %63 = vmatprep.subr.mxu0 0.0
    %64 = vmatpush1.xpose.msra.mxu0 0.0
    %65 = vmatprep.subr.mxu0 0.0
    %66 = vmatpush1.xpose.msra.mxu0 0.0
    %67 = vmatprep.subr.mxu0 0.0
    %68 = vmatpush1.xpose.msra.mxu0 0.0
    %69 = vmatprep.subr.mxu0 0.0
    %70 = vmatpush1.xpose.msra.mxu0 0.0
    %71 = vmatprep.subr.mxu0 0.0
    %72 = vmatpush1.xpose.msra.mxu0 0.0
    %73 = vmatprep.subr.mxu0 0.0
    %74 = vmatpush1.xpose.msra.mxu0 0.0
    %75 = vmatprep.subr.mxu0 0.0
    %76 = vmatpush1.xpose.msra.mxu0 0.0
    %77 = vmatprep.subr.mxu0 0.0
    %78 = vmatpush1.xpose.msra.mxu0 0.0
    %79 = vmatprep.subr.mxu0 0.0
    %80 = vmatpush1.xpose.msra.mxu0 0.0
    %81 = vmatprep.subr.mxu0 0.0
    %82 = vmatpush1.xpose.msra.mxu0 0.0
    %83 = vmatprep.subr.mxu0 0.0
    %84 = vmatpush1.xpose.msra.mxu0 0.0
    %85 = vmatprep.subr.mxu0 0.0
    %86 = vmatpush1.xpose.msra.mxu0 0.0
    %87 = vmatprep.subr.mxu0 0.0
    %88 = vmatpush1.xpose.msra.mxu0 0.0
    %89 = vmatprep.subr.mxu0 0.0
    %90 = vmatpush1.xpose.msra.mxu0 0.0
    %91 = vmatprep.subr.mxu0 0.0
    %92 = vmatpush1.xpose.msra.mxu0 0.0
    %93 = vmatprep.subr.mxu0 0.0
    %94 = vmatpush1.xpose.msra.mxu0 0.0
    %95 = vmatprep.subr.mxu0 0.0
    %96 = vmatpush1.xpose.msra.mxu0 0.0
    %97 = vmatprep.subr.mxu0 0.0
    %98 = vmatpush1.xpose.msra.mxu0 0.0
    %99 = vmatprep.subr.mxu0 0.0
    %100 = vmatpush1.xpose.msra.mxu0 0.0
    %101 = vmatprep.subr.mxu0 0.0
    %102 = vmatpush1.xpose.msra.mxu0 0.0
    %103 = vmatprep.subr.mxu0 0.0
    %104 = vmatpush1.xpose.msra.mxu0 0.0
    %105 = vmatprep.subr.mxu0 0.0
    %106 = vmatpush1.xpose.msra.mxu0 0.0
    %107 = vmatprep.subr.mxu0 0.0
    %108 = vmatpush1.xpose.msra.mxu0 0.0
    %109 = vmatprep.subr.mxu0 0.0
    %110 = vmatpush1.xpose.msra.mxu0 0.0
    %111 = vmatprep.subr.mxu0 0.0
    %112 = vmatpush1.xpose.msra.mxu0 0.0
    %113 = vmatprep.subr.mxu0 0.0
    %114 = vmatpush1.xpose.msra.mxu0 0.0
    %115 = vmatprep.mubr.f32.mxu0 0.0
    %116 = vmatmul.mubr.f32.gmra.mrb[0].mxu0 %v46
    %v117 = vpop.f32.mrb[0].mxu0
    %v118 = vadd.f32 0.0, %v117
    %v119 = vpop.f32.mrb[0].mxu0
    %120 = vdwg.mxu0
    %v122 = vsel %vm44, %v43, 0
    %v125 = vsel %vm44, %v41, 0
    %127 = vmatprep.subr.mxu0 0.0
    %128 = vmatpush1.xpose.msra.mxu0 %v125
    %129 = vmatprep.subr.mxu0 0.0
    %130 = vmatpush1.xpose.msra.mxu0 0.0
    %131 = vmatprep.subr.mxu0 0.0
    %132 = vmatpush1.xpose.msra.mxu0 0.0
    %133 = vmatprep.subr.mxu0 0.0
    %134 = vmatpush1.xpose.msra.mxu0 0.0
    %135 = vmatprep.subr.mxu0 0.0
    %136 = vmatpush1.xpose.msra.mxu0 0.0
    %137 = vmatprep.subr.mxu0 0.0
    %138 = vmatpush1.xpose.msra.mxu0 0.0
    %139 = vmatprep.subr.mxu0 0.0
    %140 = vmatpush1.xpose.msra.mxu0 0.0
    %141 = vmatprep.subr.mxu0 0.0
    %142 = vmatpush1.xpose.msra.mxu0 0.0
    %143 = vmatprep.subr.mxu0 0.0
    %144 = vmatpush1.xpose.msra.mxu0 0.0
    %145 = vmatprep.subr.mxu0 0.0
    %146 = vmatpush1.xpose.msra.mxu0 0.0
    %147 = vmatprep.subr.mxu0 0.0
    %148 = vmatpush1.xpose.msra.mxu0 0.0
    %149 = vmatprep.subr.mxu0 0.0
    %150 = vmatpush1.xpose.msra.mxu0 0.0
    %151 = vmatprep.subr.mxu0 0.0
    %152 = vmatpush1.xpose.msra.mxu0 0.0
    %153 = vmatprep.subr.mxu0 0.0
    %154 = vmatpush1.xpose.msra.mxu0 0.0
    %155 = vmatprep.subr.mxu0 0.0
    %156 = vmatpush1.xpose.msra.mxu0 0.0
    %157 = vmatprep.subr.mxu0 0.0
    %158 = vmatpush1.xpose.msra.mxu0 0.0
    %159 = vmatprep.subr.mxu0 0.0
    %160 = vmatpush1.xpose.msra.mxu0 0.0
    %161 = vmatprep.subr.mxu0 0.0
    %162 = vmatpush1.xpose.msra.mxu0 0.0
    %163 = vmatprep.subr.mxu0 0.0
    %164 = vmatpush1.xpose.msra.mxu0 0.0
    %165 = vmatprep.subr.mxu0 0.0
    %166 = vmatpush1.xpose.msra.mxu0 0.0
    %167 = vmatprep.subr.mxu0 0.0
    %168 = vmatpush1.xpose.msra.mxu0 0.0
    %169 = vmatprep.subr.mxu0 0.0
    %170 = vmatpush1.xpose.msra.mxu0 0.0
    %171 = vmatprep.subr.mxu0 0.0
    %172 = vmatpush1.xpose.msra.mxu0 0.0
    %173 = vmatprep.subr.mxu0 0.0
    %174 = vmatpush1.xpose.msra.mxu0 0.0
    %175 = vmatprep.subr.mxu0 0.0
    %176 = vmatpush1.xpose.msra.mxu0 0.0
    %177 = vmatprep.subr.mxu0 0.0
    %178 = vmatpush1.xpose.msra.mxu0 0.0
    %179 = vmatprep.subr.mxu0 0.0
    %180 = vmatpush1.xpose.msra.mxu0 0.0
    %181 = vmatprep.subr.mxu0 0.0
    %182 = vmatpush1.xpose.msra.mxu0 0.0
    %183 = vmatprep.subr.mxu0 0.0
    %184 = vmatpush1.xpose.msra.mxu0 0.0
    %185 = vmatprep.subr.mxu0 0.0
    %186 = vmatpush1.xpose.msra.mxu0 0.0
    %187 = vmatprep.subr.mxu0 0.0
    %188 = vmatpush1.xpose.msra.mxu0 0.0
    %189 = vmatprep.subr.mxu0 0.0
    %190 = vmatpush1.xpose.msra.mxu0 0.0
    %191 = vmatprep.mubr.f32.mxu0 0.0
    %192 = vmatmul.mubr.f32.gmra.mrb[0].mxu0 %v122
    %v193 = vpop.f32.mrb[0].mxu0
    %v194 = vadd.f32 0.0, %v193
    %v195 = vpop.f32.mrb[0].mxu0
    %196 = vdwg.mxu0
    %vm197 = vcmask 57344
    %v198 = vsel %vm197, %v118, -inf
    %199 = vmax.xlane.f32.xlu0 %v198
    %v200 = vpop.xlane.xlu0 %199
    %v201 = vsel %vm197, %v194, -inf
    %202 = vmax.xlane.f32.xlu0 %v201
    %v203 = vpop.xlane.xlu0 %202
    %v204 = vsub.f32 %v118, %v200
    %v205 = vsub.f32 %v194, %v203
    %v206 = vmul.f32 %v204, 1.442695
    %v207 = vpow.pop %v206
    %v208 = vmul.f32 %v205, 1.442695
    %v209 = vpow.pop %v208
    %v210 = vsel %vm197, %v207, 0.0
    %211 = vadd.xlane.f32.xlu0 %v210
    %v212 = vpop.xlane.xlu0 %211
    %v213 = vsel %vm197, %v209, 0.0
    %214 = vadd.xlane.f32.xlu0 %v213
    %v215 = vpop.xlane.xlu0 %214
    %v216 = vrcp.pop %v212
    %v217 = vmul.f32 %v207, %v216
    %v218 = vrcp.pop %v215
    %v219 = vmul.f32 %v209, %v218
    %vm220 = vcmask 64512
    %v222 = vsel %vm220, %v217, 0
    %224 = vmatprep.subr.mxu0 0.0
    %225 = vmatpush1.msra.mxu0 %v40
    %226 = vmatprep.subr.mxu0 0.0
    %227 = vmatpush1.msra.mxu0 0.0
    %228 = vmatprep.subr.mxu0 0.0
    %229 = vmatpush1.msra.mxu0 0.0
    %230 = vmatprep.subr.mxu0 0.0
    %231 = vmatpush1.msra.mxu0 0.0
    %232 = vmatprep.subr.mxu0 0.0
    %233 = vmatpush1.msra.mxu0 0.0
    %234 = vmatprep.subr.mxu0 0.0
    %235 = vmatpush1.msra.mxu0 0.0
    %236 = vmatprep.subr.mxu0 0.0
    %237 = vmatpush1.msra.mxu0 0.0
    %238 = vmatprep.subr.mxu0 0.0
    %239 = vmatpush1.msra.mxu0 0.0
    %240 = vmatprep.subr.mxu0 0.0
    %241 = vmatpush1.msra.mxu0 0.0
    %242 = vmatprep.subr.mxu0 0.0
    %243 = vmatpush1.msra.mxu0 0.0
    %244 = vmatprep.subr.mxu0 0.0
    %245 = vmatpush1.msra.mxu0 0.0
    %246 = vmatprep.subr.mxu0 0.0
    %247 = vmatpush1.msra.mxu0 0.0
    %248 = vmatprep.subr.mxu0 0.0
    %249 = vmatpush1.msra.mxu0 0.0
    %250 = vmatprep.subr.mxu0 0.0
    %251 = vmatpush1.msra.mxu0 0.0
    %252 = vmatprep.subr.mxu0 0.0
    %253 = vmatpush1.msra.mxu0 0.0
    %254 = vmatprep.subr.mxu0 0.0
    %255 = vmatpush1.msra.mxu0 0.0
    %256 = vmatprep.subr.mxu0 0.0
    %257 = vmatpush1.msra.mxu0 0.0
    %258 = vmatprep.subr.mxu0 0.0
    %259 = vmatpush1.msra.mxu0 0.0
    %260 = vmatprep.subr.mxu0 0.0
    %261 = vmatpush1.msra.mxu0 0.0
    %262 = vmatprep.subr.mxu0 0.0
    %263 = vmatpush1.msra.mxu0 0.0
    %264 = vmatprep.subr.mxu0 0.0
    %265 = vmatpush1.msra.mxu0 0.0
    %266 = vmatprep.subr.mxu0 0.0
    %267 = vmatpush1.msra.mxu0 0.0
    %268 = vmatprep.subr.mxu0 0.0
    %269 = vmatpush1.msra.mxu0 0.0
    %270 = vmatprep.subr.mxu0 0.0
    %271 = vmatpush1.msra.mxu0 0.0
    %272 = vmatprep.subr.mxu0 0.0
    %273 = vmatpush1.msra.mxu0 0.0
    %274 = vmatprep.subr.mxu0 0.0
    %275 = vmatpush1.msra.mxu0 0.0
    %276 = vmatprep.subr.mxu0 0.0
    %277 = vmatpush1.msra.mxu0 0.0
    %278 = vmatprep.subr.mxu0 0.0
    %279 = vmatpush1.msra.mxu0 0.0
    %280 = vmatprep.subr.mxu0 0.0
    %281 = vmatpush1.msra.mxu0 0.0
    %282 = vmatprep.subr.mxu0 0.0
    %283 = vmatpush1.msra.mxu0 0.0
    %284 = vmatprep.subr.mxu0 0.0
    %285 = vmatpush1.msra.mxu0 0.0
    %286 = vmatprep.subr.mxu0 0.0
    %287 = vmatpush1.msra.mxu0 0.0
    %288 = vmatprep.mubr.f32.mxu0 0.0
    %289 = vmatmul.mubr.f32.gmra.mrb[0].mxu0 %v222
    %v290 = vpop.f32.mrb[0].mxu0
    %v291 = vadd.f32 0.0, %v290
    %v292 = vpop.f32.mrb[0].mxu0
    %293 = vdwg.mxu0
    %v295 = vsel %vm220, %v219, 0
    %297 = vmatprep.subr.mxu0 0.0
    %298 = vmatpush1.msra.mxu0 %v41
    %299 = vmatprep.subr.mxu0 0.0
    %300 = vmatpush1.msra.mxu0 0.0
    %301 = vmatprep.subr.mxu0 0.0
    %302 = vmatpush1.msra.mxu0 0.0
    %303 = vmatprep.subr.mxu0 0.0
    %304 = vmatpush1.msra.mxu0 0.0
    %305 = vmatprep.subr.mxu0 0.0
    %306 = vmatpush1.msra.mxu0 0.0
    %307 = vmatprep.subr.mxu0 0.0
    %308 = vmatpush1.msra.mxu0 0.0
    %309 = vmatprep.subr.mxu0 0.0
    %310 = vmatpush1.msra.mxu0 0.0
    %311 = vmatprep.subr.mxu0 0.0
    %312 = vmatpush1.msra.mxu0 0.0
    %313 = vmatprep.subr.mxu0 0.0
    %314 = vmatpush1.msra.mxu0 0.0
    %315 = vmatprep.subr.mxu0 0.0
    %316 = vmatpush1.msra.mxu0 0.0
    %317 = vmatprep.subr.mxu0 0.0
    %318 = vmatpush1.msra.mxu0 0.0
    %319 = vmatprep.subr.mxu0 0.0
    %320 = vmatpush1.msra.mxu0 0.0
    %321 = vmatprep.subr.mxu0 0.0
    %322 = vmatpush1.msra.mxu0 0.0
    %323 = vmatprep.subr.mxu0 0.0
    %324 = vmatpush1.msra.mxu0 0.0
    %325 = vmatprep.subr.mxu0 0.0
    %326 = vmatpush1.msra.mxu0 0.0
    %327 = vmatprep.subr.mxu0 0.0
    %328 = vmatpush1.msra.mxu0 0.0
    %329 = vmatprep.subr.mxu0 0.0
    %330 = vmatpush1.msra.mxu0 0.0
    %331 = vmatprep.subr.mxu0 0.0
    %332 = vmatpush1.msra.mxu0 0.0
    %333 = vmatprep.subr.mxu0 0.0
    %334 = vmatpush1.msra.mxu0 0.0
    %335 = vmatprep.subr.mxu0 0.0
    %336 = vmatpush1.msra.mxu0 0.0
    %337 = vmatprep.subr.mxu0 0.0
    %338 = vmatpush1.msra.mxu0 0.0
    %339 = vmatprep.subr.mxu0 0.0
    %340 = vmatpush1.msra.mxu0 0.0
    %341 = vmatprep.subr.mxu0 0.0
    %342 = vmatpush1.msra.mxu0 0.0
    %343 = vmatprep.subr.mxu0 0.0
    %344 = vmatpush1.msra.mxu0 0.0
    %345 = vmatprep.subr.mxu0 0.0
    %346 = vmatpush1.msra.mxu0 0.0
    %347 = vmatprep.subr.mxu0 0.0
    %348 = vmatpush1.msra.mxu0 0.0
    %349 = vmatprep.subr.mxu0 0.0
    %350 = vmatpush1.msra.mxu0 0.0
    %351 = vmatprep.subr.mxu0 0.0
    %352 = vmatpush1.msra.mxu0 0.0
    %353 = vmatprep.subr.mxu0 0.0
    %354 = vmatpush1.msra.mxu0 0.0
    %355 = vmatprep.subr.mxu0 0.0
    %356 = vmatpush1.msra.mxu0 0.0
    %357 = vmatprep.subr.mxu0 0.0
    %358 = vmatpush1.msra.mxu0 0.0
    %359 = vmatprep.subr.mxu0 0.0
    %360 = vmatpush1.msra.mxu0 0.0
    %361 = vmatprep.mubr.f32.mxu0 0.0
    %362 = vmatmul.mubr.f32.gmra.mrb[0].mxu0 %v295
    %v363 = vpop.f32.mrb[0].mxu0
    %v364 = vadd.f32 0.0, %v363
    %v365 = vpop.f32.mrb[0].mxu0
    %366 = vdwg.mxu0
    %vm367 = vcmask 253952
    %368 = vst.msk [vmem:[#allocation7] sm:$0x1] %vm367, %v291
    %369 = vst.msk [vmem:[#allocation7 + $0x1] sm:$0x1] %vm367, %v364
    // Predicated region
    $region18: #{_attention_call.1} parent=1 // pred_check
      _
    $region19: #{_attention_call.1} parent=1 // pred_check_branch
      %371 = sbr.rel (0) target = $region21
    $region20: #{_attention_call.1} parent=1 // pred_region
      %s373 = ssub.s32 32, 32
      %374 = vsyncadd [#allocation4], %s373
      %s375 = sshll.u32 [#allocation7], 4
      %s376 = int_to_ptr.vmem [resolvable:$true] %s375
      %381 = dma.vmem_to_hbm [thread:$0]  %s376, 32, %s2, [#allocation4], 16, 16, 1
    $region21: #{_attention_call.1} parent=1 // pred_fallthru
      _
    // Predicated region
    $region22: #{_attention_call.1} parent=1 // pred_check
      _
    $region23: #{_attention_call.1} parent=1 // pred_check_branch
      %383 = sbr.rel (0) target = $region25
    $region24: #{_attention_call.1} parent=1 // pred_region
      %384 = dma.done [#allocation4], 32
    $region25: #{_attention_call.1} parent=1 // pred_fallthru
      _
    %385 = vsyncpa [#allocation3], 1
    %386 = vsyncpa [#allocation6], 1
    %387 = vsyncpa [#allocation4], 1

</llo_original>
